<compile_context>
chip_gen: v7x
topology: tpu7x:2x2x1
jax: 0.10.0
libtpu: 0.0.40
codegen_flags: <defaults>
</compile_context>

<pallas_src>
import functools

import jax
import jax.numpy as jnp
from jax import lax
from jax.experimental import pallas as pl
from jax.experimental.pallas import tpu as pltpu


def _round_up(x, m):
    return ((x + m - 1) // m) * m


@functools.lru_cache(maxsize=None)
def _buffered_one_supported():
    if not hasattr(pl, "Buffered"):
        return False
    try:
        pl.BlockSpec((8, 128), lambda i, k: (0, 0), pipeline_mode=pl.Buffered(1))
        return True
    except Exception:
        return False


@functools.lru_cache(maxsize=None)
def _vmem_ceiling_bytes():
    phys = 0
    try:
        phys = int(pltpu.get_tpu_info().vmem_capacity_bytes)
    except Exception:
        phys = 0
    if not phys:
        try:
            kind = jax.devices()[0].device_kind.lower()
            phys = (64 << 20) if "v7" in kind else (128 << 20)
        except Exception:
            phys = 64 << 20
    # Real headroom for compiler scratch / spill / streamed tiles:
    #   128 MiB (v5e/v6e) -> ~108 MiB ; 64 MiB (v7x) -> ~54 MiB.
    return min(phys - (8 << 20), int(phys * 0.85))


@functools.lru_cache(maxsize=None)
def _cores_per_chip():
    try:
        dev = jax.devices()[0]
        nc = getattr(dev, "num_cores", None)
        if nc:
            return int(nc)
        return 2 if "v7" in dev.device_kind.lower() else 1
    except Exception:
        return 1


def _choose_tk(hid, fits):
    """Largest hid chunk (multiple of 128 dividing hid, or hid itself) within budget."""
    if fits(hid, 1):
        return hid
    if hid % 128 != 0:
        return hid  # TODO(synk): pad hid to a multiple of 128 to enable streaming here.
    n128 = hid // 128
    for d in range(n128 - 1, 0, -1):
        if n128 % d:
            continue
        tk = 128 * d
        if fits(tk, hid // tk):
            return tk
    return 128


def _mlp_kernel(x_ref, w1_ref, b1_ref, g_ref, w2_ref, gw_ref, cb_ref, o_ref,
                acc_ref, sum_ref, ssq_ref, *, eps, hid, mxu_dtype):
    k = pl.program_id(1)

    @pl.when(k == 0)
    def _():
        acc_ref[...] = jnp.zeros_like(acc_ref)
        sum_ref[...] = jnp.zeros_like(sum_ref)
        ssq_ref[...] = jnp.zeros_like(ssq_ref)

    # linear_1 (this hid chunk): [tm, in] @ [in, tk], f32 accumulation on the MXU.
    h = jnp.dot(x_ref[...].astype(mxu_dtype), w1_ref[...],
                preferred_element_type=jnp.float32)
    h = h + b1_ref[...].astype(jnp.float32)

    # Exact GELU (erf form) == torch.nn.GELU() default.
    h = 0.5 * h * (1.0 + lax.erf(h * jnp.float32(0.7071067811865476)))

    # Fused LayerNorm statistics: one pass accumulating sum and sum-of-squares.
    sum_ref[...] += jnp.sum(h, axis=-1, keepdims=True)
    ssq_ref[...] += jnp.sum(h * h, axis=-1, keepdims=True)

    # linear_2 partial.  LayerNorm is affine, so it distributes over the contraction:
    #   out = inv_std * (sum_j h_j*g_j*w2_j - mean * (gamma @ w2)) + (beta @ w2 + b2)
    hg = (h * g_ref[...].astype(jnp.float32)).astype(mxu_dtype)
    acc_ref[...] += jnp.dot(hg, w2_ref[...], preferred_element_type=jnp.float32)

    @pl.when(k == pl.num_programs(1) - 1)
    def _():
        inv_hid = jnp.float32(1.0 / hid)
        mean = sum_ref[...] * inv_hid
        var = jnp.maximum(ssq_ref[...] * inv_hid - mean * mean, 0.0)
        inv_std = lax.rsqrt(var + jnp.float32(eps))
        out = inv_std * (acc_ref[...] - mean * gw_ref[...]) + cb_ref[...]
        o_ref[...] = out.astype(o_ref.dtype)


def mlp_layer(x, w1, b1, gamma, beta, w2, b2, *, eps=1e-5, tm=None, tk=None,
              mxu_dtype=None):
    """x: (..., in_hsz) -> (..., out_hsz); linear -> GELU -> LayerNorm -> linear."""
    in_hsz = x.shape[-1]
    hid = w1.shape[1]
    out_hsz = w2.shape[1]
    lead = x.shape[:-1]

    if mxu_dtype is None:
        mxu_dtype = w1.dtype          # exact torch-parity numerics by default
    mxu_dtype = jnp.dtype(mxu_dtype)

    # Lane-dense output (unmasked vst): pad out_hsz to a multiple of 128, slice after.
    out_p = _round_up(out_hsz, 128)
    if out_p != out_hsz:
        w2 = jnp.pad(w2, ((0, 0), (0, out_p - out_hsz)))
        b2 = jnp.pad(b2, (0, out_p - out_hsz))

    # Fold the LayerNorm affine params through linear_2 (tiny param-only transform, f32).
    w2_f32 = w2.astype(jnp.float32)
    gw = gamma.astype(jnp.float32)[None, :] @ w2_f32                     # (1, out_p)
    cbias = beta.astype(jnp.float32)[None, :] @ w2_f32 \
        + b2.astype(jnp.float32)[None, :]                                # (1, out_p)

    # Store / stream weights in the MXU feed dtype (bf16 recommended on v5e/v6e/v7x).
    if w1.dtype != mxu_dtype:
        w1 = w1.astype(mxu_dtype)
    if w2.dtype != mxu_dtype:
        w2 = w2.astype(mxu_dtype)

    x2d = x.reshape(-1, in_hsz)
    n_rows = x2d.shape[0]

    # Row tile: sized for pipelining (NOT MXU shape); >= 2 row blocks on 2-TC chips.
    row_align = 16 if x.dtype == jnp.bfloat16 else 8
    if tm is None:
        tm = 256
    tm = max(row_align, _round_up(min(tm, _round_up(n_rows, row_align)), row_align))
    if _cores_per_chip() > 1 and pl.cdiv(n_rows, tm) < 2 and n_rows >= 2 * row_align:
        tm = max(row_align, _round_up(pl.cdiv(n_rows, 2), row_align))

    ceiling = _vmem_ceiling_bytes()
    buffered_ok = _buffered_one_supported()
    xb = jnp.dtype(x.dtype).itemsize
    wbytes = mxu_dtype.itemsize
    pbytes = jnp.dtype(b1.dtype).itemsize

    # hid chunk: stream w1/w2 in (in, tk)/(tk, out) slabs when full residency would not
    # fit this generation's VMEM budget (v7x = 64 MiB physical).
    weight_budget = ceiling // 2

    def _fits(tk_c, n_k_c):
        bufs = 1 if (n_k_c == 1 and buffered_ok) else 2
        return bufs * ((in_hsz * tk_c + tk_c * out_p) * wbytes
                       + 2 * tk_c * pbytes) <= weight_budget

    if tk is None:
        tk = _choose_tk(hid, _fits)
    if hid % tk != 0:
        raise ValueError(f"tk={tk} must divide hid={hid}")
    if tk != hid and tk % 128 != 0:
        raise ValueError(f"tk={tk} must be a multiple of 128 (or equal hid={hid})")
    n_k = hid // tk
    resident = n_k == 1

    # Cap the live f32 intermediates (h, h*gamma) so the kernel stays MXU-bound,
    # not VMEM/spill-bound.
    tm_cap = max(row_align, ((4 << 20) // (4 * tk)) // row_align * row_align)
    tm = min(tm, tm_cap)

    grid = (pl.cdiv(n_rows, tm), n_k)

    b1_2d = b1.reshape(1, hid)
    g_2d = gamma.reshape(1, hid)

    def _spec(shape, imap, single_buffer):
        # Single-buffer blocks that never change (resident weights / folded params);
        # streamed chunks keep the default double buffering for DMA/compute overlap.
        if single_buffer and buffered_ok:
            try:
                return pl.BlockSpec(shape, imap, pipeline_mode=pl.Buffered(1))
            except Exception:
                pass
        return pl.BlockSpec(shape, imap)

    in_specs = [
        pl.BlockSpec((tm, in_hsz), lambda i, k: (i, 0)),      # x rows (pipelined)
        _spec((in_hsz, tk), lambda i, k: (0, k), resident),   # w1 chunk
        _spec((1, tk), lambda i, k: (0, k), resident),        # b1 chunk
        _spec((1, tk), lambda i, k: (0, k), resident),        # gamma chunk
        _spec((tk, out_p), lambda i, k: (k, 0), resident),    # w2 chunk
        _spec((1, out_p), lambda i, k: (0, 0), True),         # gamma @ w2
        _spec((1, out_p), lambda i, k: (0, 0), True),         # beta @ w2 + b2
    ]
    out_specs = pl.BlockSpec((tm, out_p), lambda i, k: (i, 0))

    scratch_shapes = [
        pltpu.VMEM((tm, out_p), jnp.float32),   # linear_2 accumulator
        pltpu.VMEM((tm, 1), jnp.float32),       # running sum(h)
        pltpu.VMEM((tm, 1), jnp.float32),       # running sum(h^2)
    ]

    # VMEM request (with headroom), capped per generation.
    w_bufs = 1 if (resident and buffered_ok) else 2
    needed = (2 * tm * in_hsz * xb
              + 2 * tm * out_p * xb
              + w_bufs * ((in_hsz * tk + tk * out_p) * wbytes + 2 * tk * pbytes)
              + 4 * out_p * 4
              + (tm * out_p + 2 * tm) * 4
              + 2 * tm * tk * 4)
    vmem_limit = int(max(min(needed * 5 // 4 + (2 << 20), ceiling),
                         min(32 << 20, ceiling)))

    weight_reads = 1 if resident else grid[0]
    flops = 2 * n_rows * (in_hsz * hid + hid * out_p)
    transcendentals = n_rows * hid + n_rows
    bytes_accessed = (n_rows * in_hsz * xb + n_rows * out_p * xb
                      + weight_reads * (in_hsz * hid + hid * out_p) * wbytes
                      + 2 * hid * pbytes + 2 * out_p * 4)

    out = pl.pallas_call(
        functools.partial(_mlp_kernel, eps=eps, hid=hid, mxu_dtype=mxu_dtype),
        out_shape=jax.ShapeDtypeStruct((n_rows, out_p), x.dtype),
        grid_spec=pltpu.PrefetchScalarGridSpec(
            num_scalar_prefetch=0,
            grid=grid,
            in_specs=in_specs,
            out_specs=out_specs,
            scratch_shapes=scratch_shapes,
        ),
        compiler_params=pltpu.CompilerParams(
            dimension_semantics=("parallel", "arbitrary"),
            vmem_limit_bytes=vmem_limit,
        ),
        cost_estimate=pl.CostEstimate(
            flops=flops, transcendentals=transcendentals,
            bytes_accessed=bytes_accessed,
        ),
    )(x2d, w1, b1_2d, g_2d, w2, gw, cbias)

    if out_p != out_hsz:
        out = out[:, :out_hsz]
    return out.reshape(*lead, out_hsz)


def _reference(x, w1, b1, gamma, beta, w2, b2, eps=1e-5):
    h = x @ w1 + b1
    h = 0.5 * h * (1.0 + lax.erf(h / jnp.sqrt(2.0)))
    mean = jnp.mean(h, axis=-1, keepdims=True)
    var = jnp.mean((h - mean) ** 2, axis=-1, keepdims=True)
    h = (h - mean) / jnp.sqrt(var + eps) * gamma + beta
    return h @ w2 + b2


if __name__ == "__main__":
    key = jax.random.PRNGKey(0)
    batch, seq, in_hsz, out_hsz = 2, 8, 128, 128
    hid = in_hsz * 2

    k = jax.random.split(key, 8)
    x = jax.random.normal(k[0], (batch, seq, in_hsz), dtype=jnp.float32)
    # nn.Linear-style params stored transposed: (in_features, out_features)
    w1 = jax.random.normal(k[1], (in_hsz, hid), dtype=jnp.float32) * (1.0 / jnp.sqrt(in_hsz))
    b1 = jax.random.normal(k[2], (hid,), dtype=jnp.float32) * 0.01
    gamma = jnp.ones((hid,), dtype=jnp.float32)     # LayerNorm weight init = 1
    beta = jnp.zeros((hid,), dtype=jnp.float32)     # LayerNorm bias init = 0
    w2 = jax.random.normal(k[3], (hid, out_hsz), dtype=jnp.float32) * (1.0 / jnp.sqrt(hid))
    b2 = jax.random.normal(k[4], (out_hsz,), dtype=jnp.float32) * 0.01

    ref = _reference(x, w1, b1, gamma, beta, w2, b2)

    # 1) Recommended production config: bf16 MXU feed, f32 accumulation, resident weights.
    out_bf16 = mlp_layer(x, w1, b1, gamma, beta, w2, b2, mxu_dtype=jnp.bfloat16)
    jax.block_until_ready(out_bf16)
    assert out_bf16.shape == (batch, seq, out_hsz)
    assert jnp.allclose(out_bf16, ref, atol=1e-1, rtol=1e-1)

    # 2) Exact f32 path (torch-parity numerics).
    out_f32 = mlp_layer(x, w1, b1, gamma, beta, w2, b2)
    jax.block_until_ready(out_f32)
    assert jnp.allclose(out_f32, ref, atol=1e-4, rtol=1e-4)

    # 3) Streamed (hid-chunked) path + partial last row block + padded (non-128) out_hsz.
    out3_hsz = 96
    x3 = jax.random.normal(k[5], (3, 7, in_hsz), dtype=jnp.float32)
    w2c = jax.random.normal(k[6], (hid, out3_hsz), dtype=jnp.float32) * (1.0 / jnp.sqrt(hid))
    b2c = jax.random.normal(k[7], (out3_hsz,), dtype=jnp.float32) * 0.01
    gamma3 = 1.0 + 0.1 * jax.random.normal(k[2], (hid,), dtype=jnp.float32)
    beta3 = 0.1 * jax.random.normal(k[4], (hid,), dtype=jnp.float32)
    out3 = mlp_layer(x3, w1, b1, gamma3, beta3, w2c, b2c, tm=16, tk=128)
    jax.block_until_ready(out3)
    ref3 = _reference(x3, w1, b1, gamma3, beta3, w2c, b2c)
    assert out3.shape == (3, 7, out3_hsz)
    assert jnp.allclose(out3, ref3, atol=1e-4, rtol=1e-4)

    print("KERNEL_OK")
</pallas_src>

<mosaic_0001>
module attributes {stable_mosaic.version = 11 : i64} {
  func.func @_mlp_kernel(%arg0: i32, %arg1: i32, %arg2: memref<16x128xf32, #tpu.memory_space<vmem>>, %arg3: memref<128x256xbf16, #tpu.memory_space<vmem>>, %arg4: memref<1x256xf32, #tpu.memory_space<vmem>>, %arg5: memref<1x256xf32, #tpu.memory_space<vmem>>, %arg6: memref<256x128xbf16, #tpu.memory_space<vmem>>, %arg7: memref<1x128xf32, #tpu.memory_space<vmem>>, %arg8: memref<1x128xf32, #tpu.memory_space<vmem>>, %arg9: memref<16x128xf32, #tpu.memory_space<vmem>>, %arg10: memref<16x128xf32, #tpu.memory_space<vmem>>, %arg11: memref<16x1xf32, #tpu.memory_space<vmem>>, %arg12: memref<16x1xf32, #tpu.memory_space<vmem>>) attributes {dimension_semantics = [#tpu.dimension_semantics<parallel>, #tpu.dimension_semantics<arbitrary>], iteration_bounds = array<i64: 1, 1>, scalar_prefetch = 0 : i64, scratch_operands = 3 : i64, tpu.core_type = #tpu.core_type<tc>, window_params = [{transform_indices = @transform_0, window_bounds = array<i64: 16, 128>}, {pipeline_mode = #tpu.pipeline_mode<synchronous>, transform_indices = @transform_1, window_bounds = array<i64: 128, 256>}, {pipeline_mode = #tpu.pipeline_mode<synchronous>, transform_indices = @transform_2, window_bounds = array<i64: 1, 256>}, {pipeline_mode = #tpu.pipeline_mode<synchronous>, transform_indices = @transform_3, window_bounds = array<i64: 1, 256>}, {pipeline_mode = #tpu.pipeline_mode<synchronous>, transform_indices = @transform_4, window_bounds = array<i64: 256, 128>}, {pipeline_mode = #tpu.pipeline_mode<synchronous>, transform_indices = @transform_5, window_bounds = array<i64: 1, 128>}, {pipeline_mode = #tpu.pipeline_mode<synchronous>, transform_indices = @transform_6, window_bounds = array<i64: 1, 128>}, {transform_indices = @transform_7, window_bounds = array<i64: 16, 128>}]} {
    %c0_i32 = arith.constant 0 : i32
    %0 = arith.cmpi eq, %arg1, %c0_i32 : i32
    %1 = arith.extui %0 : i1 to i32
    %c0_i32_0 = arith.constant 0 : i32
    %2 = arith.cmpi ne, %1, %c0_i32_0 : i32
    scf.if %2 {
      %cst_30 = arith.constant 0.000000e+00 : f32
      %41 = vector.broadcast %cst_30 : f32 to vector<16x128xf32>
      %c0_31 = arith.constant 0 : index
      %c0_32 = arith.constant 0 : index
      %42 = vector.load %arg10[%c0_31, %c0_32] : memref<16x128xf32, #tpu.memory_space<vmem>>, vector<16x128xf32>
      tpu.vector_store %arg10[%c0_31, %c0_32], %41 {strides = array<i32>} : memref<16x128xf32, #tpu.memory_space<vmem>>, vector<16x128xf32>,
      %cst_33 = arith.constant 0.000000e+00 : f32
      %43 = vector.broadcast %cst_33 : f32 to vector<16x1xf32>
      %c0_34 = arith.constant 0 : index
      %c0_35 = arith.constant 0 : index
      %44 = vector.load %arg11[%c0_34, %c0_35] : memref<16x1xf32, #tpu.memory_space<vmem>>, vector<16x1xf32>
      tpu.vector_store %arg11[%c0_34, %c0_35], %43 {strides = array<i32>} : memref<16x1xf32, #tpu.memory_space<vmem>>, vector<16x1xf32>,
      %cst_36 = arith.constant 0.000000e+00 : f32
      %45 = vector.broadcast %cst_36 : f32 to vector<16x1xf32>
      %c0_37 = arith.constant 0 : index
      %c0_38 = arith.constant 0 : index
      %46 = vector.load %arg12[%c0_37, %c0_38] : memref<16x1xf32, #tpu.memory_space<vmem>>, vector<16x1xf32>
      tpu.vector_store %arg12[%c0_37, %c0_38], %45 {strides = array<i32>} : memref<16x1xf32, #tpu.memory_space<vmem>>, vector<16x1xf32>,
    } else {
    }
    %c0 = arith.constant 0 : index
    %c0_1 = arith.constant 0 : index
    %3 = vector.load %arg2[%c0, %c0_1] : memref<16x128xf32, #tpu.memory_space<vmem>>, vector<16x128xf32>
    %4 = arith.truncf %3 : vector<16x128xf32> to vector<16x128xbf16>
    %c0_2 = arith.constant 0 : index
    %c0_3 = arith.constant 0 : index
    %5 = vector.load %arg3[%c0_2, %c0_3] : memref<128x256xbf16, #tpu.memory_space<vmem>>, vector<128x256xbf16>
    %cst = arith.constant dense<0.000000e+00> : vector<16x256xf32>
    %6 = tpu.matmul %4, %5, %cst {dimension_numbers = #tpu.dot_dimension_numbers<[1], [0], [0], [1], [0, 0, 1, 1], [], []>} : vector<16x128xbf16>, vector<128x256xbf16>, vector<16x256xf32> -> vector<16x256xf32>
    %c0_4 = arith.constant 0 : index
    %c0_5 = arith.constant 0 : index
    %7 = vector.load %arg4[%c0_4, %c0_5] : memref<1x256xf32, #tpu.memory_space<vmem>>, vector<1x256xf32>
    %8 = vector.broadcast %7 : vector<1x256xf32> to vector<16x256xf32>
    %9 = arith.addf %6, %8 : vector<16x256xf32>
    %cst_6 = arith.constant 5.000000e-01 : f32
    %10 = vector.broadcast %cst_6 : f32 to vector<16x256xf32>
    %11 = arith.mulf %10, %9 : vector<16x256xf32>
    %cst_7 = arith.constant 0.707106769 : f32
    %12 = vector.broadcast %cst_7 : f32 to vector<16x256xf32>
    %13 = arith.mulf %9, %12 : vector<16x256xf32>
    %14 = math.erf %13 : vector<16x256xf32>
    %cst_8 = arith.constant 1.000000e+00 : f32
    %15 = vector.broadcast %cst_8 : f32 to vector<16x256xf32>
    %16 = arith.addf %15, %14 : vector<16x256xf32>
    %17 = arith.mulf %11, %16 : vector<16x256xf32>
    %c0_9 = arith.constant 0 : index
    %c0_10 = arith.constant 0 : index
    %18 = vector.load %arg11[%c0_9, %c0_10] : memref<16x1xf32, #tpu.memory_space<vmem>>, vector<16x1xf32>
    %cst_11 = arith.constant dense<0.000000e+00> : vector<16xf32>
    %19 = vector.multi_reduction <add>, %17, %cst_11 [1] : vector<16x256xf32> to vector<16xf32>
    %20 = vector.shape_cast %19 : vector<16xf32> to vector<16x1xf32>
    %21 = arith.addf %18, %20 : vector<16x1xf32>
    %c0_12 = arith.constant 0 : index
    %c0_13 = arith.constant 0 : index
    %22 = vector.load %arg11[%c0_12, %c0_13] : memref<16x1xf32, #tpu.memory_space<vmem>>, vector<16x1xf32>
    tpu.vector_store %arg11[%c0_12, %c0_13], %21 {strides = array<i32>} : memref<16x1xf32, #tpu.memory_space<vmem>>, vector<16x1xf32>,
    %c0_14 = arith.constant 0 : index
    %c0_15 = arith.constant 0 : index
    %23 = vector.load %arg12[%c0_14, %c0_15] : memref<16x1xf32, #tpu.memory_space<vmem>>, vector<16x1xf32>
    %24 = arith.mulf %17, %17 : vector<16x256xf32>
    %cst_16 = arith.constant dense<0.000000e+00> : vector<16xf32>
    %25 = vector.multi_reduction <add>, %24, %cst_16 [1] : vector<16x256xf32> to vector<16xf32>
    %26 = vector.shape_cast %25 : vector<16xf32> to vector<16x1xf32>
    %27 = arith.addf %23, %26 : vector<16x1xf32>
    %c0_17 = arith.constant 0 : index
    %c0_18 = arith.constant 0 : index
    %28 = vector.load %arg12[%c0_17, %c0_18] : memref<16x1xf32, #tpu.memory_space<vmem>>, vector<16x1xf32>
    tpu.vector_store %arg12[%c0_17, %c0_18], %27 {strides = array<i32>} : memref<16x1xf32, #tpu.memory_space<vmem>>, vector<16x1xf32>,
    %c0_19 = arith.constant 0 : index
    %c0_20 = arith.constant 0 : index
    %29 = vector.load %arg5[%c0_19, %c0_20] : memref<1x256xf32, #tpu.memory_space<vmem>>, vector<1x256xf32>
    %30 = vector.broadcast %29 : vector<1x256xf32> to vector<16x256xf32>
    %31 = arith.mulf %17, %30 : vector<16x256xf32>
    %32 = arith.truncf %31 : vector<16x256xf32> to vector<16x256xbf16>
    %c0_21 = arith.constant 0 : index
    %c0_22 = arith.constant 0 : index
    %33 = vector.load %arg10[%c0_21, %c0_22] : memref<16x128xf32, #tpu.memory_space<vmem>>, vector<16x128xf32>
    %c0_23 = arith.constant 0 : index
    %c0_24 = arith.constant 0 : index
    %34 = vector.load %arg6[%c0_23, %c0_24] : memref<256x128xbf16, #tpu.memory_space<vmem>>, vector<256x128xbf16>
    %cst_25 = arith.constant dense<0.000000e+00> : vector<16x128xf32>
    %35 = tpu.matmul %32, %34, %cst_25 {dimension_numbers = #tpu.dot_dimension_numbers<[1], [0], [0], [1], [0, 0, 1, 1], [], []>} : vector<16x256xbf16>, vector<256x128xbf16>, vector<16x128xf32> -> vector<16x128xf32>
    %36 = arith.addf %33, %35 : vector<16x128xf32>
    %c0_26 = arith.constant 0 : index
    %c0_27 = arith.constant 0 : index
    %37 = vector.load %arg10[%c0_26, %c0_27] : memref<16x128xf32, #tpu.memory_space<vmem>>, vector<16x128xf32>
    tpu.vector_store %arg10[%c0_26, %c0_27], %36 {strides = array<i32>} : memref<16x128xf32, #tpu.memory_space<vmem>>, vector<16x128xf32>,
    %c0_i32_28 = arith.constant 0 : i32
    %38 = arith.cmpi eq, %arg1, %c0_i32_28 : i32
    %39 = arith.extui %38 : i1 to i32
    %c0_i32_29 = arith.constant 0 : i32
    %40 = arith.cmpi ne, %39, %c0_i32_29 : i32
    scf.if %40 {
      %c0_30 = arith.constant 0 : index
      %c0_31 = arith.constant 0 : index
      %41 = vector.load %arg11[%c0_30, %c0_31] : memref<16x1xf32, #tpu.memory_space<vmem>>, vector<16x1xf32>
      %cst_32 = arith.constant 3.906250e-03 : f32
      %42 = vector.broadcast %cst_32 : f32 to vector<16x1xf32>
      %43 = arith.mulf %41, %42 : vector<16x1xf32>
      %c0_33 = arith.constant 0 : index
      %c0_34 = arith.constant 0 : index
      %44 = vector.load %arg12[%c0_33, %c0_34] : memref<16x1xf32, #tpu.memory_space<vmem>>, vector<16x1xf32>
      %cst_35 = arith.constant 3.906250e-03 : f32
      %45 = vector.broadcast %cst_35 : f32 to vector<16x1xf32>
      %46 = arith.mulf %44, %45 : vector<16x1xf32>
      %47 = arith.mulf %43, %43 : vector<16x1xf32>
      %48 = arith.subf %46, %47 : vector<16x1xf32>
      %cst_36 = arith.constant 0.000000e+00 : f32
      %49 = vector.broadcast %cst_36 : f32 to vector<16x1xf32>
      %50 = arith.maximumf %48, %49 : vector<16x1xf32>
      %cst_37 = arith.constant 9.99999974E-6 : f32
      %51 = vector.broadcast %cst_37 : f32 to vector<16x1xf32>
      %52 = arith.addf %50, %51 : vector<16x1xf32>
      %53 = math.rsqrt %52 : vector<16x1xf32>
      %c0_38 = arith.constant 0 : index
      %c0_39 = arith.constant 0 : index
      %54 = vector.load %arg10[%c0_38, %c0_39] : memref<16x128xf32, #tpu.memory_space<vmem>>, vector<16x128xf32>
      %c0_40 = arith.constant 0 : index
      %c0_41 = arith.constant 0 : index
      %55 = vector.load %arg7[%c0_40, %c0_41] : memref<1x128xf32, #tpu.memory_space<vmem>>, vector<1x128xf32>
      %56 = vector.broadcast %43 : vector<16x1xf32> to vector<16x128xf32>
      %57 = vector.broadcast %55 : vector<1x128xf32> to vector<16x128xf32>
      %58 = arith.mulf %56, %57 : vector<16x128xf32>
      %59 = arith.subf %54, %58 : vector<16x128xf32>
      %60 = vector.broadcast %53 : vector<16x1xf32> to vector<16x128xf32>
      %61 = arith.mulf %60, %59 : vector<16x128xf32>
      %c0_42 = arith.constant 0 : index
      %c0_43 = arith.constant 0 : index
      %62 = vector.load %arg8[%c0_42, %c0_43] : memref<1x128xf32, #tpu.memory_space<vmem>>, vector<1x128xf32>
      %63 = vector.broadcast %62 : vector<1x128xf32> to vector<16x128xf32>
      %64 = arith.addf %61, %63 : vector<16x128xf32>
      %c0_44 = arith.constant 0 : index
      %c0_45 = arith.constant 0 : index
      %65 = vector.load %arg9[%c0_44, %c0_45] : memref<16x128xf32, #tpu.memory_space<vmem>>, vector<16x128xf32>
      tpu.vector_store %arg9[%c0_44, %c0_45], %64 {strides = array<i32>} : memref<16x128xf32, #tpu.memory_space<vmem>>, vector<16x128xf32>,
    } else {
    }
    return
  }
  func.func @transform_0(%arg0: i32, %arg1: i32) -> (i32, i32) {
    %c0_i32 = arith.constant 0 : i32
    %c0_i32_0 = arith.constant 0 : i32
    return %arg0, %c0_i32 : i32, i32
  }
  func.func @transform_1(%arg0: i32, %arg1: i32) -> (i32, i32) {
    %c0_i32 = arith.constant 0 : i32
    %c0_i32_0 = arith.constant 0 : i32
    return %c0_i32, %arg1 : i32, i32
  }
  func.func @transform_2(%arg0: i32, %arg1: i32) -> (i32, i32) {
    %c0_i32 = arith.constant 0 : i32
    %c0_i32_0 = arith.constant 0 : i32
    return %c0_i32, %arg1 : i32, i32
  }
  func.func @transform_3(%arg0: i32, %arg1: i32) -> (i32, i32) {
    %c0_i32 = arith.constant 0 : i32
    %c0_i32_0 = arith.constant 0 : i32
    return %c0_i32, %arg1 : i32, i32
  }
  func.func @transform_4(%arg0: i32, %arg1: i32) -> (i32, i32) {
    %c0_i32 = arith.constant 0 : i32
    %c0_i32_0 = arith.constant 0 : i32
    return %arg1, %c0_i32 : i32, i32
  }
  func.func @transform_5(%arg0: i32, %arg1: i32) -> (i32, i32) {
    %c0_i32 = arith.constant 0 : i32
    %c0_i32_0 = arith.constant 0 : i32
    %c0_i32_1 = arith.constant 0 : i32
    return %c0_i32, %c0_i32_0 : i32, i32
  }
  func.func @transform_6(%arg0: i32, %arg1: i32) -> (i32, i32) {
    %c0_i32 = arith.constant 0 : i32
    %c0_i32_0 = arith.constant 0 : i32
    %c0_i32_1 = arith.constant 0 : i32
    return %c0_i32, %c0_i32_0 : i32, i32
  }
  func.func @transform_7(%arg0: i32, %arg1: i32) -> (i32, i32) {
    %c0_i32 = arith.constant 0 : i32
    %c0_i32_0 = arith.constant 0 : i32
    return %arg0, %c0_i32 : i32, i32
  }
}

</mosaic_0001>

<llo_original>
// kernel: tpu_custom_call.1
$region0: #{tpu_custom_call.1}
  #allocation0 [shape = 'u32[]', space=smem, size = 0x4, offset = 0x4, fixed_abs, tag = 'smem constant byte address 0x4 - core index']
  #allocation1 [shape = 'u32[144,128]{1,0:T(1,128)}', space=vmem, size = 0x12000, scoped, tag = 'internal scratch']
  #allocation2 [shape = 'f32[16,128]{1,0:T(8,128)}', space=vmem, size = 0x2000, scoped, tag = 'scratch operand']
  #allocation3 [shape = 'f32[16,1]{1,0:T(8,128)}', space=vmem, size = 0x2000, scoped, tag = 'scratch operand']
  #allocation4 [shape = 'f32[16,1]{1,0:T(8,128)}', space=vmem, size = 0x2000, scoped, tag = 'scratch operand']
  %s0 = inlined_call_operand.hbm [shape: f32[16,128], index: 0, kind: input, shape index: {}]
  %s1 = inlined_call_operand.hbm [shape: bf16[128,256], index: 1, kind: input, shape index: {}]
  %s2 = inlined_call_operand.vmem [shape: f32[1,256], index: 2, kind: input, shape index: {}]
  %s3 = inlined_call_operand.vmem [shape: f32[1,256], index: 3, kind: input, shape index: {}]
  %s4 = inlined_call_operand.hbm [shape: bf16[256,128], index: 4, kind: input, shape index: {}]
  %s5 = inlined_call_operand.vmem [shape: f32[1,128], index: 5, kind: input, shape index: {}]
  %s6 = inlined_call_operand.vmem [shape: f32[1,128], index: 6, kind: input, shape index: {}]
  %s7 = inlined_call_operand.hbm [shape: f32[16,128], index: 7, kind: output, shape index: {}]
  %s8 = sld [smem:[#allocation0]]
  $region58: #{tpu_custom_call.1} parent=0
    _
  %s10 = ssub.s32 1, %s8
  %s11 = scalar_select 0, %s10, %s8
  $region1: #{tpu_custom_call.1} parent=0
    #allocation5 [shape = 'u8[8192]{0}', space=vmem, size = 0x2000, scoped, tag = 'input window, operand 0, single buffered']
    #allocation6 [shape = 's32[1]{0}', space=sflag, size = 0x4, scoped, tag = 'scoped memory for tpu_custom_call.1']
    #allocation7 [shape = 's32[1]{0}', space=sflag, size = 0x4, scoped, tag = 'scoped memory for tpu_custom_call.1']
    #allocation8 [shape = 'u8[65536]{0}', space=vmem, size = 0x10000, scoped, tag = 'input window, operand 1, single buffered']
    #allocation9 [shape = 's32[1]{0}', space=sflag, size = 0x4, scoped, tag = 'scoped memory for tpu_custom_call.1']
    #allocation10 [shape = 'u8[65536]{0}', space=vmem, size = 0x10000, scoped, tag = 'input window, operand 4, single buffered']
    #allocation11 [shape = 'u8[8192]{0}', space=vmem, size = 0x2000, scoped, tag = 'output window, operand 0, single buffered']
    %12 = vsyncpa [#allocation6], 0
    %13 = vsyncpa [#allocation9], 0
    %14 = vsyncpa [#allocation7], 0
    // Predicated region
    $region2: #{tpu_custom_call.1} parent=1 // pred_check
      _
    $region3: #{tpu_custom_call.1} parent=1 // pred_check_branch
      %16 = sbr.rel (0) target = $region5
    $region4: #{tpu_custom_call.1} parent=1 // pred_region
      %s18 = ssub.s32 256, 256
      %19 = vsyncadd [#allocation6], %s18
      %s20 = sshll.u32 [#allocation5], 4
      %s21 = int_to_ptr.vmem [resolvable:$true] %s20
      %26 = dma.hbm_to_vmem [thread:$0]  %s0, 256, %s21, [#allocation6], 128, 128, 8
    $region5: #{tpu_custom_call.1} parent=1 // pred_fallthru
      _
    // Predicated region
    $region6: #{tpu_custom_call.1} parent=1 // pred_check
      _
    $region7: #{tpu_custom_call.1} parent=1 // pred_check_branch
      %28 = sbr.rel (0) target = $region9
    $region8: #{tpu_custom_call.1} parent=1 // pred_region
      %s30 = ssub.s32 2048, 2048
      %31 = vsyncadd [#allocation9], %s30
      %s32 = sshll.u32 [#allocation8], 4
      %s33 = int_to_ptr.vmem [resolvable:$true] %s32
      %38 = dma.hbm_to_vmem [thread:$0]  %s1, 2048, %s33, [#allocation9], 128, 128, 8
    $region9: #{tpu_custom_call.1} parent=1 // pred_fallthru
      _
    // Predicated region
    $region10: #{tpu_custom_call.1} parent=1 // pred_check
      _
    $region11: #{tpu_custom_call.1} parent=1 // pred_check_branch
      %40 = sbr.rel (0) target = $region13
    $region12: #{tpu_custom_call.1} parent=1 // pred_region
      _
    $region13: #{tpu_custom_call.1} parent=1 // pred_fallthru
      _
    // Predicated region
    $region14: #{tpu_custom_call.1} parent=1 // pred_check
      _
    $region15: #{tpu_custom_call.1} parent=1 // pred_check_branch
      %42 = sbr.rel (0) target = $region17
    $region16: #{tpu_custom_call.1} parent=1 // pred_region
      _
    $region17: #{tpu_custom_call.1} parent=1 // pred_fallthru
      _
    // Predicated region
    $region18: #{tpu_custom_call.1} parent=1 // pred_check
      _
    $region19: #{tpu_custom_call.1} parent=1 // pred_check_branch
      %44 = sbr.rel (0) target = $region21
    $region20: #{tpu_custom_call.1} parent=1 // pred_region
      %s46 = ssub.s32 2048, 2048
      %47 = vsyncadd [#allocation9], %s46
      %s48 = sshll.u32 [#allocation10], 4
      %s49 = int_to_ptr.vmem [resolvable:$true] %s48
      %54 = dma.hbm_to_vmem [thread:$0]  %s4, 2048, %s49, [#allocation9], 64, 64, 4
    $region21: #{tpu_custom_call.1} parent=1 // pred_fallthru
      _
    // Predicated region
    $region22: #{tpu_custom_call.1} parent=1 // pred_check
      _
    $region23: #{tpu_custom_call.1} parent=1 // pred_check_branch
      %56 = sbr.rel (0) target = $region25
    $region24: #{tpu_custom_call.1} parent=1 // pred_region
      _
    $region25: #{tpu_custom_call.1} parent=1 // pred_fallthru
      _
    // Predicated region
    $region26: #{tpu_custom_call.1} parent=1 // pred_check
      _
    $region27: #{tpu_custom_call.1} parent=1 // pred_check_branch
      %58 = sbr.rel (0) target = $region29
    $region28: #{tpu_custom_call.1} parent=1 // pred_region
      _
    $region29: #{tpu_custom_call.1} parent=1 // pred_fallthru
      _
    // Predicated region
    $region30: #{tpu_custom_call.1} parent=1 // pred_check
      _
    $region31: #{tpu_custom_call.1} parent=1 // pred_check_branch
      %60 = sbr.rel (0) target = $region33
    $region32: #{tpu_custom_call.1} parent=1 // pred_region
      %61 = dma.done [#allocation6], 256
    $region33: #{tpu_custom_call.1} parent=1 // pred_fallthru
      _
    // Predicated region
    $region34: #{tpu_custom_call.1} parent=1 // pred_check
      _
    $region35: #{tpu_custom_call.1} parent=1 // pred_check_branch
      %63 = sbr.rel (0) target = $region37
    $region36: #{tpu_custom_call.1} parent=1 // pred_region
      %64 = dma.done [#allocation9], 2048
    $region37: #{tpu_custom_call.1} parent=1 // pred_fallthru
      _
    // Predicated region
    $region38: #{tpu_custom_call.1} parent=1 // pred_check
      _
    $region39: #{tpu_custom_call.1} parent=1 // pred_check_branch
      %66 = sbr.rel (0) target = $region41
    $region40: #{tpu_custom_call.1} parent=1 // pred_region
      %67 = dma.done [#allocation9], 2048
    $region41: #{tpu_custom_call.1} parent=1 // pred_fallthru
      _
    %p69 = scmp.eq.s32.totalorder 0, 0
    // Predicated region
    $region42: #{tpu_custom_call.1} parent=1 // pred_check
      %p70 = pneg %p69
    $region43: #{tpu_custom_call.1} parent=1 // pred_check_branch
      %72 = sbr.rel (%p70) target = $region45
    $region44: #{tpu_custom_call.1} parent=1 // pred_region
      %73 = vst [vmem:[#allocation2] sm:$0xff] 0.0
      %74 = vst [vmem:[#allocation2 + $0x8] sm:$0xff] 0.0
      %vm75 = vcmask 7168
      %76 = vst.msk [vmem:[#allocation3] sm:$0xff] %vm75, 0.0
      %77 = vst.msk [vmem:[#allocation3 + $0x8] sm:$0xff] %vm75, 0.0
      %78 = vst.msk [vmem:[#allocation4] sm:$0xff] %vm75, 0.0
      %79 = vst.msk [vmem:[#allocation4 + $0x8] sm:$0xff] %vm75, 0.0
    $region45: #{tpu_custom_call.1} parent=1 // pred_fallthru
      _
    %v80 = vld [vmem:[#allocation5] sm:$0xff]
    %v81 = vld [vmem:[#allocation5 + $0x8] sm:$0xff]
    %v82 = vpack.c.bf16 %v81, %v80
    %v83 = vld [vmem:[#allocation8] sm:$0xff]
    %v84 = vld [vmem:[#allocation8 + $0x8] sm:$0xff]
    %v85 = vld [vmem:[#allocation8 + $0x10] sm:$0xff]
    %v86 = vld [vmem:[#allocation8 + $0x18] sm:$0xff]
    %v87 = vld [vmem:[#allocation8 + $0x20] sm:$0xff]
    %v88 = vld [vmem:[#allocation8 + $0x28] sm:$0xff]
    %v89 = vld [vmem:[#allocation8 + $0x30] sm:$0xff]
    %v90 = vld [vmem:[#allocation8 + $0x38] sm:$0xff]
    %v91 = vld [vmem:[#allocation8 + $0x40] sm:$0xff]
    %v92 = vld [vmem:[#allocation8 + $0x48] sm:$0xff]
    %v93 = vld [vmem:[#allocation8 + $0x50] sm:$0xff]
    %v94 = vld [vmem:[#allocation8 + $0x58] sm:$0xff]
    %v95 = vld [vmem:[#allocation8 + $0x60] sm:$0xff]
    %v96 = vld [vmem:[#allocation8 + $0x68] sm:$0xff]
    %v97 = vld [vmem:[#allocation8 + $0x70] sm:$0xff]
    %v98 = vld [vmem:[#allocation8 + $0x78] sm:$0xff]
    %v99 = vld [vmem:[%s2] sm:$0x3]
    %v101 = vlaneseq
    %v102 = vshrl.u32 %v101, 7
    %v103 = vsub.s32 0, %v102
    %v104 = vrot.slane %v99, %v103
    %v105 = vlaneseq
    %v106 = vshrl.u32 %v105, 7
    %v107 = vsub.s32 1, %v106
    %v108 = vrot.slane %v99, %v107
    %v127 = vunpack.c.l.b16 %v83
    %v128 = vunpack.c.h.b16 %v83
    %v129 = vunpack.c.l.b16 %v84
    %v130 = vunpack.c.h.b16 %v84
    %v131 = vunpack.c.l.b16 %v85
    %v132 = vunpack.c.h.b16 %v85
    %v133 = vunpack.c.l.b16 %v86
    %v134 = vunpack.c.h.b16 %v86
    %v135 = vunpack.c.l.b16 %v87
    %v136 = vunpack.c.h.b16 %v87
    %v137 = vunpack.c.l.b16 %v88
    %v138 = vunpack.c.h.b16 %v88
    %v139 = vunpack.c.l.b16 %v89
    %v140 = vunpack.c.h.b16 %v89
    %v141 = vunpack.c.l.b16 %v90
    %v142 = vunpack.c.h.b16 %v90
    %v143 = vunpack.c.l.b16 %v91
    %v144 = vunpack.c.h.b16 %v91
    %v145 = vunpack.c.l.b16 %v92
    %v146 = vunpack.c.h.b16 %v92
    %v147 = vunpack.c.l.b16 %v93
    %v148 = vunpack.c.h.b16 %v93
    %v149 = vunpack.c.l.b16 %v94
    %v150 = vunpack.c.h.b16 %v94
    %v151 = vunpack.c.l.b16 %v95
    %v152 = vunpack.c.h.b16 %v95
    %v153 = vunpack.c.l.b16 %v96
    %v154 = vunpack.c.h.b16 %v96
    %v155 = vunpack.c.l.b16 %v97
    %v156 = vunpack.c.h.b16 %v97
    %v157 = vunpack.c.l.b16 %v98
    %v158 = vunpack.c.h.b16 %v98
    %v159 = vpack.c.b16 %v129, %v127
    %v160 = vpack.c.b16 %v130, %v128
    %v161 = vpack.c.b16 %v133, %v131
    %v162 = vpack.c.b16 %v134, %v132
    %v163 = vpack.c.b16 %v137, %v135
    %v164 = vpack.c.b16 %v138, %v136
    %v165 = vpack.c.b16 %v141, %v139
    %v166 = vpack.c.b16 %v142, %v140
    %v167 = vpack.c.b16 %v145, %v143
    %v168 = vpack.c.b16 %v146, %v144
    %v169 = vpack.c.b16 %v149, %v147
    %v170 = vpack.c.b16 %v150, %v148
    %v171 = vpack.c.b16 %v153, %v151
    %v172 = vpack.c.b16 %v154, %v152
    %v173 = vpack.c.b16 %v157, %v155
    %v174 = vpack.c.b16 %v158, %v156
    %191 = vmatprep.subr.bf16.mxu0 %v160
    %192 = vmatpush1.bf16.msra.mxu0 %v159
    %193 = vmatprep.subr.bf16.mxu0 %v162
    %194 = vmatpush1.bf16.msra.mxu0 %v161
    %195 = vmatprep.subr.bf16.mxu0 %v164
    %196 = vmatpush1.bf16.msra.mxu0 %v163
    %197 = vmatprep.subr.bf16.mxu0 %v166
    %198 = vmatpush1.bf16.msra.mxu0 %v165
    %199 = vmatprep.subr.bf16.mxu0 %v168
    %200 = vmatpush1.bf16.msra.mxu0 %v167
    %201 = vmatprep.subr.bf16.mxu0 %v170
    %202 = vmatpush1.bf16.msra.mxu0 %v169
    %203 = vmatprep.subr.bf16.mxu0 %v172
    %204 = vmatpush1.bf16.msra.mxu0 %v171
    %205 = vmatprep.subr.bf16.mxu0 %v174
    %206 = vmatpush1.bf16.msra.mxu0 %v173
    %207 = vmatprep.subr.bf16.mxu0 0
    %208 = vmatpush1.bf16.msra.mxu0 0
    %209 = vmatprep.subr.bf16.mxu0 0
    %210 = vmatpush1.bf16.msra.mxu0 0
    %211 = vmatprep.subr.bf16.mxu0 0
    %212 = vmatpush1.bf16.msra.mxu0 0
    %213 = vmatprep.subr.bf16.mxu0 0
    %214 = vmatpush1.bf16.msra.mxu0 0
    %215 = vmatprep.subr.bf16.mxu0 0
    %216 = vmatpush1.bf16.msra.mxu0 0
    %217 = vmatprep.subr.bf16.mxu0 0
    %218 = vmatpush1.bf16.msra.mxu0 0
    %219 = vmatprep.subr.bf16.mxu0 0
    %220 = vmatpush1.bf16.msra.mxu0 0
    %221 = vmatprep.subr.bf16.mxu0 0
    %222 = vmatpush1.bf16.msra.mxu0 0
    %223 = vmatprep.mubr.bf16.mxu0 0
    %224 = vmatmul.mubr.bf16.gmra.mrb[0].mxu0 %v82
    %v225 = vpop.f32.mrb[0].mxu0
    %v226 = vadd.f32 %v104, %v225
    %v227 = vpop.f32.mrb[0].mxu0
    %v228 = vadd.f32 %v108, %v227
    %v229 = vpop.f32.mrb[0].mxu0
    %v230 = vadd.f32 %v104, %v229
    %v231 = vpop.f32.mrb[0].mxu0
    %v232 = vadd.f32 %v108, %v231
    %233 = vdwg.mxu0
    %v234 = vmul.f32 %v226, 0.5
    %v235 = vmul.f32 %v228, 0.5
    %v236 = vmul.f32 %v230, 0.5
    %v237 = vmul.f32 %v232, 0.5
    %v238 = vmul.f32 %v226, 0.70710677
    %v239 = vmul.f32 %v228, 0.70710677
    %v240 = vmul.f32 %v230, 0.70710677
    %v241 = vmul.f32 %v232, 0.70710677
    %v242 = verf.f32.pop %v238
    %v243 = verf.f32.pop %v239
    %v244 = verf.f32.pop %v240
    %v245 = verf.f32.pop %v241
    %v246 = vadd.f32 %v242, 1.0
    %v247 = vadd.f32 %v243, 1.0
    %v248 = vadd.f32 %v244, 1.0
    %v249 = vadd.f32 %v245, 1.0
    %v250 = vmul.f32 %v234, %v246
    %v251 = vmul.f32 %v235, %v247
    %v252 = vmul.f32 %v236, %v248
    %v253 = vmul.f32 %v237, %v249
    %v254 = vld [vmem:[#allocation3] sm:$0xff]
    %v255 = vld [vmem:[#allocation3 + $0x8] sm:$0xff]
    %v256 = vadd.f32 %v250, %v251
    %257 = vadd.xlane.f32.xlu0 %v256
    %v258 = vpop.xlane.xlu0 %257
    %v259 = vadd.f32 %v252, %v253
    %260 = vadd.xlane.f32.xlu0 %v259
    %v261 = vpop.xlane.xlu0 %260
    %v262 = vadd.f32 %v254, %v258
    %v263 = vadd.f32 %v255, %v261
    %vm264 = vcmask 7168
    %265 = vst.msk [vmem:[#allocation3] sm:$0xff] %vm264, %v262
    %266 = vst.msk [vmem:[#allocation3 + $0x8] sm:$0xff] %vm264, %v263
    %v267 = vld [vmem:[#allocation4] sm:$0xff]
    %v268 = vld [vmem:[#allocation4 + $0x8] sm:$0xff]
    %v269 = vmul.f32 %v250, %v250
    %v270 = vmul.f32 %v251, %v251
    %v271 = vmul.f32 %v252, %v252
    %v272 = vmul.f32 %v253, %v253
    %v273 = vadd.f32 %v269, %v270
    %274 = vadd.xlane.f32.xlu0 %v273
    %v275 = vpop.xlane.xlu0 %274
    %v276 = vadd.f32 %v271, %v272
    %277 = vadd.xlane.f32.xlu0 %v276
    %v278 = vpop.xlane.xlu0 %277
    %v279 = vadd.f32 %v267, %v275
    %v280 = vadd.f32 %v268, %v278
    %281 = vst.msk [vmem:[#allocation4] sm:$0xff] %vm264, %v279
    %282 = vst.msk [vmem:[#allocation4 + $0x8] sm:$0xff] %vm264, %v280
    %v283 = vld [vmem:[%s3] sm:$0x3]
    %v285 = vlaneseq
    %v286 = vshrl.u32 %v285, 7
    %v287 = vsub.s32 0, %v286
    %v288 = vrot.slane %v283, %v287
    %v289 = vlaneseq
    %v290 = vshrl.u32 %v289, 7
    %v291 = vsub.s32 1, %v290
    %v292 = vrot.slane %v283, %v291
    %v295 = vmul.f32 %v250, %v288
    %v296 = vmul.f32 %v251, %v292
    %v297 = vmul.f32 %v252, %v288
    %v298 = vmul.f32 %v253, %v292
    %v299 = vpack.c.bf16 %v297, %v295
    %v300 = vpack.c.bf16 %v298, %v296
    %v301 = vld [vmem:[#allocation2] sm:$0xff]
    %v302 = vld [vmem:[#allocation2 + $0x8] sm:$0xff]
    %v303 = vld [vmem:[#allocation10] sm:$0xf]
    %v304 = vld [vmem:[#allocation10 + $0x4] sm:$0xf]
    %v305 = vld [vmem:[#allocation10 + $0x8] sm:$0xf]
    %v306 = vld [vmem:[#allocation10 + $0xc] sm:$0xf]
    %v307 = vld [vmem:[#allocation10 + $0x10] sm:$0xf]
    %v308 = vld [vmem:[#allocation10 + $0x14] sm:$0xf]
    %v309 = vld [vmem:[#allocation10 + $0x18] sm:$0xf]
    %v310 = vld [vmem:[#allocation10 + $0x1c] sm:$0xf]
    %v311 = vld [vmem:[#allocation10 + $0x20] sm:$0xf]
    %v312 = vld [vmem:[#allocation10 + $0x24] sm:$0xf]
    %v313 = vld [vmem:[#allocation10 + $0x28] sm:$0xf]
    %v314 = vld [vmem:[#allocation10 + $0x2c] sm:$0xf]
    %v315 = vld [vmem:[#allocation10 + $0x30] sm:$0xf]
    %v316 = vld [vmem:[#allocation10 + $0x34] sm:$0xf]
    %v317 = vld [vmem:[#allocation10 + $0x38] sm:$0xf]
    %v318 = vld [vmem:[#allocation10 + $0x3c] sm:$0xf]
    %v319 = vld [vmem:[#allocation10 + $0x40] sm:$0xf]
    %v320 = vld [vmem:[#allocation10 + $0x44] sm:$0xf]
    %v321 = vld [vmem:[#allocation10 + $0x48] sm:$0xf]
    %v322 = vld [vmem:[#allocation10 + $0x4c] sm:$0xf]
    %v323 = vld [vmem:[#allocation10 + $0x50] sm:$0xf]
    %v324 = vld [vmem:[#allocation10 + $0x54] sm:$0xf]
    %v325 = vld [vmem:[#allocation10 + $0x58] sm:$0xf]
    %v326 = vld [vmem:[#allocation10 + $0x5c] sm:$0xf]
    %v327 = vld [vmem:[#allocation10 + $0x60] sm:$0xf]
    %v328 = vld [vmem:[#allocation10 + $0x64] sm:$0xf]
    %v329 = vld [vmem:[#allocation10 + $0x68] sm:$0xf]
    %v330 = vld [vmem:[#allocation10 + $0x6c] sm:$0xf]
    %v331 = vld [vmem:[#allocation10 + $0x70] sm:$0xf]
    %v332 = vld [vmem:[#allocation10 + $0x74] sm:$0xf]
    %v333 = vld [vmem:[#allocation10 + $0x78] sm:$0xf]
    %v334 = vld [vmem:[#allocation10 + $0x7c] sm:$0xf]
    %v367 = vunpack.c.l.b16 %v303
    %v368 = vunpack.c.l.b16 %v304
    %v369 = vunpack.c.l.b16 %v305
    %v370 = vunpack.c.l.b16 %v306
    %v371 = vunpack.c.l.b16 %v307
    %v372 = vunpack.c.l.b16 %v308
    %v373 = vunpack.c.l.b16 %v309
    %v374 = vunpack.c.l.b16 %v310
    %v375 = vunpack.c.l.b16 %v311
    %v376 = vunpack.c.l.b16 %v312
    %v377 = vunpack.c.l.b16 %v313
    %v378 = vunpack.c.l.b16 %v314
    %v379 = vunpack.c.l.b16 %v315
    %v380 = vunpack.c.l.b16 %v316
    %v381 = vunpack.c.l.b16 %v317
    %v382 = vunpack.c.l.b16 %v318
    %v383 = vunpack.c.l.b16 %v319
    %v384 = vunpack.c.l.b16 %v320
    %v385 = vunpack.c.l.b16 %v321
    %v386 = vunpack.c.l.b16 %v322
    %v387 = vunpack.c.l.b16 %v323
    %v388 = vunpack.c.l.b16 %v324
    %v389 = vunpack.c.l.b16 %v325
    %v390 = vunpack.c.l.b16 %v326
    %v391 = vunpack.c.l.b16 %v327
    %v392 = vunpack.c.l.b16 %v328
    %v393 = vunpack.c.l.b16 %v329
    %v394 = vunpack.c.l.b16 %v330
    %v395 = vunpack.c.l.b16 %v331
    %v396 = vunpack.c.l.b16 %v332
    %v397 = vunpack.c.l.b16 %v333
    %v398 = vunpack.c.l.b16 %v334
    %v399 = vpack.c.b16 %v368, %v367
    %v400 = vpack.c.b16 %v370, %v369
    %v401 = vpack.c.b16 %v372, %v371
    %v402 = vpack.c.b16 %v374, %v373
    %v403 = vpack.c.b16 %v376, %v375
    %v404 = vpack.c.b16 %v378, %v377
    %v405 = vpack.c.b16 %v380, %v379
    %v406 = vpack.c.b16 %v382, %v381
    %v407 = vpack.c.b16 %v384, %v383
    %v408 = vpack.c.b16 %v386, %v385
    %v409 = vpack.c.b16 %v388, %v387
    %v410 = vpack.c.b16 %v390, %v389
    %v411 = vpack.c.b16 %v392, %v391
    %v412 = vpack.c.b16 %v394, %v393
    %v413 = vpack.c.b16 %v396, %v395
    %v414 = vpack.c.b16 %v398, %v397
    %431 = vmatprep.subr.bf16.mxu0 0
    %432 = vmatpush1.bf16.msra.mxu0 %v399
    %433 = vmatprep.subr.bf16.mxu0 0
    %434 = vmatpush1.bf16.msra.mxu0 %v400
    %435 = vmatprep.subr.bf16.mxu0 0
    %436 = vmatpush1.bf16.msra.mxu0 %v401
    %437 = vmatprep.subr.bf16.mxu0 0
    %438 = vmatpush1.bf16.msra.mxu0 %v402
    %439 = vmatprep.subr.bf16.mxu0 0
    %440 = vmatpush1.bf16.msra.mxu0 %v403
    %441 = vmatprep.subr.bf16.mxu0 0
    %442 = vmatpush1.bf16.msra.mxu0 %v404
    %443 = vmatprep.subr.bf16.mxu0 0
    %444 = vmatpush1.bf16.msra.mxu0 %v405
    %445 = vmatprep.subr.bf16.mxu0 0
    %446 = vmatpush1.bf16.msra.mxu0 %v406
    %447 = vmatprep.subr.bf16.mxu0 0
    %448 = vmatpush1.bf16.msra.mxu0 %v407
    %449 = vmatprep.subr.bf16.mxu0 0
    %450 = vmatpush1.bf16.msra.mxu0 %v408
    %451 = vmatprep.subr.bf16.mxu0 0
    %452 = vmatpush1.bf16.msra.mxu0 %v409
    %453 = vmatprep.subr.bf16.mxu0 0
    %454 = vmatpush1.bf16.msra.mxu0 %v410
    %455 = vmatprep.subr.bf16.mxu0 0
    %456 = vmatpush1.bf16.msra.mxu0 %v411
    %457 = vmatprep.subr.bf16.mxu0 0
    %458 = vmatpush1.bf16.msra.mxu0 %v412
    %459 = vmatprep.subr.bf16.mxu0 0
    %460 = vmatpush1.bf16.msra.mxu0 %v413
    %461 = vmatprep.subr.bf16.mxu0 0
    %462 = vmatpush1.bf16.msra.mxu0 %v414
    %463 = vmatprep.mubr.bf16.mxu0 %v300
    %464 = vmatmul.mubr.bf16.gmra.mrb[0].mxu0 %v299
    %v465 = vpop.f32.mrb[0].mxu0
    %v466 = vadd.f32 0.0, %v465
    %v467 = vpop.f32.mrb[0].mxu0
    %v468 = vpop.f32.mrb[0].mxu0
    %v469 = vadd.f32 0.0, %v468
    %v470 = vpop.f32.mrb[0].mxu0
    %471 = vdwg.mxu0
    %v472 = vadd.f32 %v301, %v466
    %v473 = vadd.f32 %v302, %v469
    %474 = vst [vmem:[#allocation2] sm:$0xff] %v472
    %475 = vst [vmem:[#allocation2 + $0x8] sm:$0xff] %v473
    // Predicated region
    $region46: #{tpu_custom_call.1} parent=1 // pred_check
      %p476 = pneg %p69
    $region47: #{tpu_custom_call.1} parent=1 // pred_check_branch
      %478 = sbr.rel (%p476) target = $region49
    $region48: #{tpu_custom_call.1} parent=1 // pred_region
      %v479 = vld [vmem:[#allocation3] sm:$0xff]
      %v480 = vld [vmem:[#allocation3 + $0x8] sm:$0xff]
      %v481 = vmul.f32 %v479, 0.00390625
      %v482 = vmul.f32 %v480, 0.00390625
      %v483 = vld [vmem:[#allocation4] sm:$0xff]
      %v484 = vld [vmem:[#allocation4 + $0x8] sm:$0xff]
      %v485 = vmul.f32 %v483, 0.00390625
      %v486 = vmul.f32 %v484, 0.00390625
      %v487 = vmul.f32 %v481, %v481
      %v488 = vmul.f32 %v482, %v482
      %v489 = vsub.f32 %v485, %v487
      %v490 = vsub.f32 %v486, %v488
      %v491 = vmax.f32 %v489, 0.0
      %v492 = vmax.f32 %v490, 0.0
      %v493 = vadd.f32 %v491, 1e-05
      %v494 = vadd.f32 %v492, 1e-05
      %v495 = vrsqrt.pop %v493
      %v496 = vrsqrt.pop %v494
      %v497 = vld [vmem:[#allocation2] sm:$0xff]
      %v498 = vld [vmem:[#allocation2 + $0x8] sm:$0xff]
      %v499 = vld [vmem:[%s5] sm:$0x1]
      %501 = vset.pattern.permute.xlu0 0
      %502 = vperm.xlu0 %501, %v481
      %v503 = vpop.permute.xlu0 %502
      %506 = vset.pattern.permute.xlu0 0
      %507 = vperm.xlu0 %506, %v482
      %v508 = vpop.permute.xlu0 %507
      %v511 = vlaneseq
      %v512 = vshrl.u32 %v511, 7
      %v513 = vsub.s32 0, %v512
      %v514 = vrot.slane %v499, %v513
      %v516 = vmul.f32 %v503, %v514
      %v517 = vmul.f32 %v508, %v514
      %v518 = vsub.f32 %v497, %v516
      %v519 = vsub.f32 %v498, %v517
      %521 = vset.pattern.permute.xlu0 0
      %522 = vperm.xlu0 %521, %v495
      %v523 = vpop.permute.xlu0 %522
      %526 = vset.pattern.permute.xlu0 0
      %527 = vperm.xlu0 %526, %v496
      %v528 = vpop.permute.xlu0 %527
      %v530 = vmul.f32 %v523, %v518
      %v531 = vmul.f32 %v528, %v519
      %v532 = vld [vmem:[%s6] sm:$0x1]
      %v534 = vlaneseq
      %v535 = vshrl.u32 %v534, 7
      %v536 = vsub.s32 0, %v535
      %v537 = vrot.slane %v532, %v536
      %v539 = vadd.f32 %v530, %v537
      %v540 = vadd.f32 %v531, %v537
      %541 = vst [vmem:[#allocation11] sm:$0xff] %v539
      %542 = vst [vmem:[#allocation11 + $0x8] sm:$0xff] %v540
    $region49: #{tpu_custom_call.1} parent=1 // pred_fallthru
      _
    // Predicated region
    $region50: #{tpu_custom_call.1} parent=1 // pred_check
      _
    $region51: #{tpu_custom_call.1} parent=1 // pred_check_branch
      %544 = sbr.rel (0) target = $region53
    $region52: #{tpu_custom_call.1} parent=1 // pred_region
      %s546 = ssub.s32 256, 256
      %547 = vsyncadd [#allocation7], %s546
      %s548 = sshll.u32 [#allocation11], 4
      %s549 = int_to_ptr.vmem [resolvable:$true] %s548
      %554 = dma.vmem_to_hbm [thread:$0]  %s549, 256, %s7, [#allocation7], 128, 128, 8
    $region53: #{tpu_custom_call.1} parent=1 // pred_fallthru
      _
    // Predicated region
    $region54: #{tpu_custom_call.1} parent=1 // pred_check
      _
    $region55: #{tpu_custom_call.1} parent=1 // pred_check_branch
      %556 = sbr.rel (0) target = $region57
    $region56: #{tpu_custom_call.1} parent=1 // pred_region
      %557 = dma.done [#allocation7], 256
    $region57: #{tpu_custom_call.1} parent=1 // pred_fallthru
      _
    %558 = vsyncpa [#allocation6], 1
    %559 = vsyncpa [#allocation9], 1
    %560 = vsyncpa [#allocation7], 1

</llo_original>
